<compile_context>
chip_gen: v5e
topology: v5e:2x2
jax: 0.10.0
libtpu: 0.0.40
codegen_flags: <defaults>
</compile_context>

<pallas_src>
import jax
import jax.numpy as jnp
from jax.experimental import pallas as pl
from jax.experimental.pallas import tpu as pltpu

_T = 4.0
_LANE = 128
_TARGET_BLOCK_BYTES = 2 * 1024 * 1024  # ~2 MiB per block; 4x (in/out, dbl-buf) = 8 MiB


def _multispike_kernel(x_ref, o_ref, *, t, inv_t):
    x = x_ref[...]
    # clamp(x, 0, T) -> round (half-to-even, same as torch.round) -> * (1/T)
    y = jnp.round(jnp.clip(x, 0.0, t))
    o_ref[...] = (y * inv_t).astype(o_ref.dtype)


def _sublane_for_dtype(dtype):
    nbytes = jnp.dtype(dtype).itemsize
    return {4: 8, 2: 16, 1: 32}.get(nbytes, 8)


def _run_2d(x2d, t, inv_t):
    """Run the elementwise kernel over a lane-dense [rows, 128] slab."""
    rows, lane = x2d.shape
    dtype = x2d.dtype
    sublane = _sublane_for_dtype(dtype)
    itemsize = jnp.dtype(dtype).itemsize

    # Rows per tile: big enough to amortize per-grid-step overhead, small
    # enough that in+out double-buffered blocks fit scoped VMEM everywhere.
    target_rows = max(sublane, _TARGET_BLOCK_BYTES // (lane * itemsize))
    target_rows = (target_rows // sublane) * sublane
    tile_rows = min(target_rows, rows)
    grid = (pl.cdiv(rows, tile_rows),)

    n_elems = rows * lane
    cost = pl.CostEstimate(
        flops=3 * n_elems,
        transcendentals=0,
        bytes_accessed=2 * n_elems * itemsize,
    )

    kernel = lambda xr, orr: _multispike_kernel(xr, orr, t=t, inv_t=inv_t)

    return pl.pallas_call(
        kernel,
        out_shape=jax.ShapeDtypeStruct((rows, lane), dtype),
        grid_spec=pltpu.PrefetchScalarGridSpec(
            num_scalar_prefetch=0,
            grid=grid,
            in_specs=[pl.BlockSpec((tile_rows, lane), lambda i: (i, 0))],
            out_specs=pl.BlockSpec((tile_rows, lane), lambda i: (i, 0)),
        ),
        compiler_params=pltpu.CompilerParams(
            dimension_semantics=("parallel",),   # v7x: shard rows across 2 TCs
            vmem_limit_bytes=32 * 1024 * 1024,
        ),
        cost_estimate=cost,
    )(x2d)


def multispike_norm4(x, vth=1.0, t=_T):
    """Inference forward of MultiSpike_norm4. Elementwise; any shape/dtype."""
    del vth  # unused in the PyTorch eval path; kept for signature parity
    orig_shape = x.shape
    n_elems = x.size
    inv_t = 1.0 / t
    sublane = _sublane_for_dtype(x.dtype)
    align = sublane * _LANE

    if n_elems % align == 0:
        # Fast path: contiguous reshape is metadata-only -> no extra HBM passes.
        x2d = jnp.reshape(x, (n_elems // _LANE, _LANE))
        out2d = _run_2d(x2d, t, inv_t)
        return out2d.reshape(orig_shape)

    # Ragged fallback (rare for conv activations): pad the flat tail.
    # TODO(synk): mask the tail block in-kernel instead of the pad/slice copy.
    rows_pad = pl.cdiv(n_elems, align) * sublane
    padded = rows_pad * _LANE
    x_flat = jnp.pad(jnp.ravel(x), (0, padded - n_elems))
    out2d = _run_2d(x_flat.reshape(rows_pad, _LANE), t, inv_t)
    return out2d.reshape(-1)[:n_elems].reshape(orig_shape)


def _reference(x, t=_T):
    return jnp.round(jnp.clip(x, 0.0, t)) / t


if __name__ == "__main__":
    key = jax.random.PRNGKey(0)
    # Small NCHW input consistent with a conv-backbone activation.
    x = jax.random.normal(key, (2, 4, 16, 16), dtype=jnp.float32) * 3.0

    out = multispike_norm4(x)
    out = jax.block_until_ready(out)

    ref = _reference(x)
    assert out.shape == x.shape
    assert out.dtype == x.dtype
    assert jnp.allclose(out, ref, atol=1e-6), "mismatch vs reference"

    print("KERNEL_OK")
</pallas_src>

<mosaic_0001>
module attributes {stable_mosaic.version = 11 : i64} {
  func.func @_lambda_(%arg0: i32, %arg1: memref<16x128xf32, #tpu.memory_space<vmem>>, %arg2: memref<16x128xf32, #tpu.memory_space<vmem>>) attributes {dimension_semantics = [#tpu.dimension_semantics<parallel>], iteration_bounds = array<i64: 1>, scalar_prefetch = 0 : i64, scratch_operands = 0 : i64, tpu.core_type = #tpu.core_type<tc>, window_params = [{transform_indices = @transform_0, window_bounds = array<i64: 16, 128>}, {transform_indices = @transform_1, window_bounds = array<i64: 16, 128>}]} {
    %c0 = arith.constant 0 : index
    %c0_0 = arith.constant 0 : index
    %0 = vector.load %arg1[%c0, %c0_0] : memref<16x128xf32, #tpu.memory_space<vmem>>, vector<16x128xf32>
    %cst = arith.constant 0.000000e+00 : f32
    %cst_1 = arith.constant 4.000000e+00 : f32
    %1 = vector.broadcast %cst : f32 to vector<16x128xf32>
    %2 = arith.maximumf %1, %0 : vector<16x128xf32>
    %3 = vector.broadcast %cst_1 : f32 to vector<16x128xf32>
    %4 = arith.minimumf %3, %2 : vector<16x128xf32>
    %5 = math.roundeven %4 : vector<16x128xf32>
    %cst_2 = arith.constant 2.500000e-01 : f32
    %6 = vector.broadcast %cst_2 : f32 to vector<16x128xf32>
    %7 = arith.mulf %5, %6 : vector<16x128xf32>
    %c0_3 = arith.constant 0 : index
    %c0_4 = arith.constant 0 : index
    %8 = vector.load %arg2[%c0_3, %c0_4] : memref<16x128xf32, #tpu.memory_space<vmem>>, vector<16x128xf32>
    tpu.vector_store %arg2[%c0_3, %c0_4], %7 {strides = array<i32>} : memref<16x128xf32, #tpu.memory_space<vmem>>, vector<16x128xf32>,
    return
  }
  func.func @transform_0(%arg0: i32) -> (i32, i32) {
    %c0_i32 = arith.constant 0 : i32
    %c0_i32_0 = arith.constant 0 : i32
    return %arg0, %c0_i32 : i32, i32
  }
  func.func @transform_1(%arg0: i32) -> (i32, i32) {
    %c0_i32 = arith.constant 0 : i32
    %c0_i32_0 = arith.constant 0 : i32
    return %arg0, %c0_i32 : i32, i32
  }
}

</mosaic_0001>

<llo_original>
// kernel: tpu_custom_call.1
$region0: #{tpu_custom_call.1}
  #allocation0 [shape = 'u32[]', space=smem, size = 0x4, offset = 0x4, fixed_abs, tag = 'smem constant byte address 0x4 - core index']
  #allocation1 [shape = 'u32[72,128]{1,0:T(1,128)}', space=vmem, size = 0x9000, scoped, tag = 'internal scratch']
  %s0 = inlined_call_operand.hbm [shape: f32[16,128], index: 0, kind: input, shape index: {}]
  %s1 = inlined_call_operand.hbm [shape: f32[16,128], index: 1, kind: output, shape index: {}]
  %s2 = sld [smem:[#allocation0]]
  $region18: #{tpu_custom_call.1} parent=0
    _
  %s4 = ssub.s32 1, %s2
  %s5 = scalar_select 0, %s4, %s2
  $region1: #{tpu_custom_call.1} parent=0
    #allocation2 [shape = 'u8[8192]{0}', space=vmem, size = 0x2000, scoped, tag = 'input window, operand 0, single buffered']
    #allocation3 [shape = 's32[1]{0}', space=sflag, size = 0x4, scoped, tag = 'scoped memory for tpu_custom_call.1']
    #allocation4 [shape = 's32[1]{0}', space=sflag, size = 0x4, scoped, tag = 'scoped memory for tpu_custom_call.1']
    #allocation5 [shape = 'u8[8192]{0}', space=vmem, size = 0x2000, scoped, tag = 'output window, operand 0, single buffered']
    %6 = vsyncpa [#allocation3], 0
    %7 = vsyncpa [#allocation4], 0
    // Predicated region
    $region2: #{tpu_custom_call.1} parent=1 // pred_check
      _
    $region3: #{tpu_custom_call.1} parent=1 // pred_check_branch
      %9 = sbr.rel (0) target = $region5
    $region4: #{tpu_custom_call.1} parent=1 // pred_region
      %11 = vsyncadd [#allocation3], 0
      %s12 = sshll.u32 %s0, 4
      %s13 = int_to_ptr.hbm [resolvable:$true] %s12
      %s14 = sshll.u32 [#allocation2], 4
      %s15 = int_to_ptr.vmem [resolvable:$true] %s14
      %20 = dma.hbm_to_vmem [thread:$0]  %s13, 256, %s15, [#allocation3], 128, 128, 8
    $region5: #{tpu_custom_call.1} parent=1 // pred_fallthru
      _
    // Predicated region
    $region6: #{tpu_custom_call.1} parent=1 // pred_check
      _
    $region7: #{tpu_custom_call.1} parent=1 // pred_check_branch
      %22 = sbr.rel (0) target = $region9
    $region8: #{tpu_custom_call.1} parent=1 // pred_region
      %24 = dma.done [#allocation3], 256
    $region9: #{tpu_custom_call.1} parent=1 // pred_fallthru
      _
    %v25 = vld [vmem:[#allocation2] sm:$0xff]
    %v26 = vld [vmem:[#allocation2 + $0x8] sm:$0xff]
    %v27 = vmax.f32 %v25, 0.0
    %v28 = vmax.f32 %v26, 0.0
    %v29 = vmin.f32 %v27, 4.0
    %v30 = vmin.f32 %v28, 4.0
    %v31 = vround.ne.pseudo %v29
    %v32 = vround.ne.pseudo %v30
    %v33 = vmul.f32 %v31, 0.25
    %v34 = vmul.f32 %v32, 0.25
    %35 = vst [vmem:[#allocation5] sm:$0xff] %v33
    %36 = vst [vmem:[#allocation5 + $0x8] sm:$0xff] %v34
    // Predicated region
    $region10: #{tpu_custom_call.1} parent=1 // pred_check
      _
    $region11: #{tpu_custom_call.1} parent=1 // pred_check_branch
      %38 = sbr.rel (0) target = $region13
    $region12: #{tpu_custom_call.1} parent=1 // pred_region
      %40 = vsyncadd [#allocation4], 0
      %s41 = sshll.u32 [#allocation5], 4
      %s42 = int_to_ptr.vmem [resolvable:$true] %s41
      %s43 = sshll.u32 %s1, 4
      %s44 = int_to_ptr.hbm [resolvable:$true] %s43
      %49 = dma.vmem_to_hbm [thread:$0]  %s42, 256, %s44, [#allocation4], 128, 128, 8
    $region13: #{tpu_custom_call.1} parent=1 // pred_fallthru
      _
    // Predicated region
    $region14: #{tpu_custom_call.1} parent=1 // pred_check
      _
    $region15: #{tpu_custom_call.1} parent=1 // pred_check_branch
      %51 = sbr.rel (0) target = $region17
    $region16: #{tpu_custom_call.1} parent=1 // pred_region
      %53 = dma.done [#allocation4], 256
    $region17: #{tpu_custom_call.1} parent=1 // pred_fallthru
      _
    %54 = vsyncpa [#allocation3], 1
    %55 = vsyncpa [#allocation4], 1

</llo_original>
